<compile_context>
chip_gen: v7x
topology: tpu7x:2x2x1
jax: 0.10.0
libtpu: 0.0.40
codegen_flags: <defaults>
</compile_context>

<pallas_src>
import jax
import jax.numpy as jnp
from jax.experimental import pallas as pl
from jax.experimental.pallas import tpu as pltpu

IN_FEATURES = 8        # 1+1+1+1 + sensor_count(4)
HIDDEN = 32
OUT_FEATURES = 4

HIDDEN_PAD = 128       # lane-padded hidden width (MXU / vreg alignment)
SUBLANE = 16           # batch padding granule (covers f32=8 and bf16=16 sublanes)
TB_MAX = 4096          # max batch-tile rows (~4.5 MiB double-buffered working set)


def _round_up(n, m):
    return ((n + m - 1) // m) * m


def _choose_tiling(B):
    """Pick (batch_tile, padded_batch).  >=2 grid steps whenever possible so the
    'parallel' batch axis shards across both TensorCores on v7x."""
    b_pad = _round_up(B, SUBLANE)
    if b_pad <= SUBLANE:
        return b_pad, b_pad                       # single tiny tile
    n_steps = max(2, pl.cdiv(b_pad, TB_MAX))
    tb = _round_up(pl.cdiv(b_pad, n_steps), SUBLANE)
    b_pad = _round_up(b_pad, tb)
    return tb, b_pad


def _mlp_kernel(x_ref, w1_ref, b1_ref, w2_ref, b2_ref, o_ref):
    """One batch tile of tanh(relu(x @ W1 + b1) @ W2 + b2).

      x_ref : (tb, IN_FEATURES)           f32  (cast to bf16 in-kernel)
      w1_ref: (IN_FEATURES, HIDDEN_PAD)   bf16 (zero-padded cols), resident
      b1_ref: (1, HIDDEN_PAD)             f32  (zero-padded cols), resident
      w2_ref: (HIDDEN_PAD, OUT_FEATURES)  bf16 (zero-padded rows), resident
      b2_ref: (1, OUT_FEATURES)           f32, resident
      o_ref : (tb, OUT_FEATURES)          f32
    """
    x = x_ref[...].astype(jnp.bfloat16)
    # Layer 1: Linear(8, 32->128) + ReLU   (bf16 MXU, f32 accumulate, f32 VPU)
    h = jnp.dot(x, w1_ref[...], preferred_element_type=jnp.float32) + b1_ref[...]
    h = jnp.maximum(h, 0.0)
    # Layer 2: Linear(128, 4) + Tanh       (narrow N -> same MXU pass count)
    y = jnp.dot(h.astype(jnp.bfloat16), w2_ref[...],
                preferred_element_type=jnp.float32) + b2_ref[...]
    o_ref[...] = jnp.tanh(y)


def prepare_params(w1, b1, w2, b2):
    """One-time prep: PyTorch (out, in) -> (in, out), bf16 cast, zero-pad hidden."""
    w1 = jnp.asarray(w1, jnp.float32)
    b1 = jnp.asarray(b1, jnp.float32)
    w2 = jnp.asarray(w2, jnp.float32)
    b2 = jnp.asarray(b2, jnp.float32)
    w1_p = jnp.zeros((IN_FEATURES, HIDDEN_PAD), jnp.bfloat16).at[:, :HIDDEN].set(
        w1.T.astype(jnp.bfloat16))
    b1_p = jnp.zeros((1, HIDDEN_PAD), jnp.float32).at[:, :HIDDEN].set(
        b1.reshape(1, -1))
    w2_p = jnp.zeros((HIDDEN_PAD, OUT_FEATURES), jnp.bfloat16).at[:HIDDEN, :].set(
        w2.T.astype(jnp.bfloat16))
    b2_p = b2.reshape(1, OUT_FEATURES)
    return w1_p, b1_p, w2_p, b2_p


def mlp_forward(x, params):
    """x: (B, IN_FEATURES); params from prepare_params()."""
    w1_p, b1_p, w2_p, b2_p = params
    x = jnp.asarray(x, jnp.float32)               # torch.tensor(input, dtype=float)
    B = x.shape[0]

    tb, b_pad = _choose_tiling(B)
    grid = (b_pad // tb,)

    # Only materialize a padded copy of x when needed (tail rows are zero; the
    # corresponding junk output rows are sliced off below).
    x_in = x if b_pad == B else jnp.pad(x, ((0, b_pad - B), (0, 0)))

    flops = 2 * b_pad * (IN_FEATURES * HIDDEN_PAD + HIDDEN_PAD * OUT_FEATURES)
    bytes_accessed = (b_pad * IN_FEATURES * 4            # x (f32 read)
                      + w1_p.size * 2 + w2_p.size * 2    # resident weights
                      + b1_p.size * 4 + b2_p.size * 4
                      + b_pad * OUT_FEATURES * 4)        # output (f32 write)

    out = pl.pallas_call(
        _mlp_kernel,
        out_shape=jax.ShapeDtypeStruct((b_pad, OUT_FEATURES), jnp.float32),
        grid=grid,
        in_specs=[
            pl.BlockSpec((tb, IN_FEATURES), lambda i: (i, 0)),              # streamed
            pl.BlockSpec((IN_FEATURES, HIDDEN_PAD), lambda i: (0, 0)),      # resident
            pl.BlockSpec((1, HIDDEN_PAD), lambda i: (0, 0)),                # resident
            pl.BlockSpec((HIDDEN_PAD, OUT_FEATURES), lambda i: (0, 0)),     # resident
            pl.BlockSpec((1, OUT_FEATURES), lambda i: (0, 0)),              # resident
        ],
        out_specs=pl.BlockSpec((tb, OUT_FEATURES), lambda i: (i, 0)),
        compiler_params=pltpu.CompilerParams(
            dimension_semantics=("parallel",),
            vmem_limit_bytes=32 * 1024 * 1024,
        ),
        cost_estimate=pl.CostEstimate(
            flops=flops,
            transcendentals=b_pad * OUT_FEATURES,
            bytes_accessed=bytes_accessed),
    )(x_in, w1_p, b1_p, w2_p, b2_p)

    return out if b_pad == B else out[:B]


def init_params(key):
    """Deterministic init mimicking PyTorch Linear default U(-1/sqrt(fan_in), 1/sqrt(fan_in))."""
    k1, k2, k3, k4 = jax.random.split(key, 4)
    bound1 = 1.0 / jnp.sqrt(IN_FEATURES)
    bound2 = 1.0 / jnp.sqrt(HIDDEN)
    w1 = jax.random.uniform(k1, (HIDDEN, IN_FEATURES), jnp.float32, -bound1, bound1)
    b1 = jax.random.uniform(k2, (HIDDEN,), jnp.float32, -bound1, bound1)
    w2 = jax.random.uniform(k3, (OUT_FEATURES, HIDDEN), jnp.float32, -bound2, bound2)
    b2 = jax.random.uniform(k4, (OUT_FEATURES,), jnp.float32, -bound2, bound2)
    return w1, b1, w2, b2


# TODO(synk): mutate / mutate_randomly / clone are host-side GA utilities, not part
# of the forward pass; they are intentionally not implemented as kernels.

if __name__ == "__main__":
    key = jax.random.PRNGKey(0)
    pkey, xkey = jax.random.split(key)
    w1, b1, w2, b2 = init_params(pkey)

    # Weight prep done once, outside the forward (perf-review item 6).
    params = prepare_params(w1, b1, w2, b2)
    fwd = jax.jit(lambda xx: mlp_forward(xx, params))

    batch = 8
    x = jax.random.normal(xkey, (batch, IN_FEATURES), jnp.float32)

    out = jax.block_until_ready(fwd(x))
    assert out.shape == (batch, OUT_FEATURES)

    # Reference 1: same math with matched bf16 matmul inputs / f32 accumulate.
    xb = x.astype(jnp.bfloat16)
    h_ref = jnp.maximum(
        jnp.dot(xb, w1.T.astype(jnp.bfloat16), preferred_element_type=jnp.float32) + b1,
        0.0)
    ref_bf16 = jnp.tanh(
        jnp.dot(h_ref.astype(jnp.bfloat16), w2.T.astype(jnp.bfloat16),
                preferred_element_type=jnp.float32) + b2)
    assert jnp.allclose(out, ref_bf16, atol=2e-3, rtol=2e-3)

    # Reference 2: pure f32 PyTorch-equivalent math (looser tol due to bf16 matmuls).
    ref_f32 = jnp.tanh(jnp.maximum(x @ w1.T + b1, 0.0) @ w2.T + b2)
    assert jnp.allclose(out, ref_f32, atol=5e-2, rtol=5e-2)

    # Also exercise a larger, non-tile-multiple batch (multi-step parallel grid).
    xkey2 = jax.random.PRNGKey(1)
    xl = jax.random.normal(xkey2, (1000, IN_FEATURES), jnp.float32)
    out_l = jax.block_until_ready(jax.jit(lambda xx: mlp_forward(xx, params))(xl))
    ref_l = jnp.tanh(jnp.maximum(xl @ w1.T + b1, 0.0) @ w2.T + b2)
    assert out_l.shape == (1000, OUT_FEATURES)
    assert jnp.allclose(out_l, ref_l, atol=5e-2, rtol=5e-2)

    print("KERNEL_OK")
</pallas_src>

<mosaic_0001>
module attributes {stable_mosaic.version = 11 : i64} {
  func.func @_mlp_kernel(%arg0: i32, %arg1: memref<16x8xf32, #tpu.memory_space<vmem>>, %arg2: memref<8x128xbf16, #tpu.memory_space<vmem>>, %arg3: memref<1x128xf32, #tpu.memory_space<vmem>>, %arg4: memref<128x4xbf16, #tpu.memory_space<vmem>>, %arg5: memref<1x4xf32, #tpu.memory_space<vmem>>, %arg6: memref<16x4xf32, #tpu.memory_space<vmem>>) attributes {dimension_semantics = [#tpu.dimension_semantics<parallel>], iteration_bounds = array<i64: 1>, scalar_prefetch = 0 : i64, scratch_operands = 0 : i64, tpu.core_type = #tpu.core_type<tc>, window_params = [{transform_indices = @transform_0, window_bounds = array<i64: 16, 8>}, {pipeline_mode = #tpu.pipeline_mode<synchronous>, transform_indices = @transform_1, window_bounds = array<i64: 8, 128>}, {pipeline_mode = #tpu.pipeline_mode<synchronous>, transform_indices = @transform_2, window_bounds = array<i64: 1, 128>}, {pipeline_mode = #tpu.pipeline_mode<synchronous>, transform_indices = @transform_3, window_bounds = array<i64: 128, 4>}, {pipeline_mode = #tpu.pipeline_mode<synchronous>, transform_indices = @transform_4, window_bounds = array<i64: 1, 4>}, {transform_indices = @transform_5, window_bounds = array<i64: 16, 4>}]} {
    %c0 = arith.constant 0 : index
    %c0_0 = arith.constant 0 : index
    %0 = vector.load %arg1[%c0, %c0_0] : memref<16x8xf32, #tpu.memory_space<vmem>>, vector<16x8xf32>
    %1 = arith.truncf %0 : vector<16x8xf32> to vector<16x8xbf16>
    %c0_1 = arith.constant 0 : index
    %c0_2 = arith.constant 0 : index
    %2 = vector.load %arg2[%c0_1, %c0_2] : memref<8x128xbf16, #tpu.memory_space<vmem>>, vector<8x128xbf16>
    %cst = arith.constant dense<0.000000e+00> : vector<16x128xf32>
    %3 = tpu.matmul %1, %2, %cst {dimension_numbers = #tpu.dot_dimension_numbers<[1], [0], [0], [1], [0, 0, 1, 1], [], []>} : vector<16x8xbf16>, vector<8x128xbf16>, vector<16x128xf32> -> vector<16x128xf32>
    %c0_3 = arith.constant 0 : index
    %c0_4 = arith.constant 0 : index
    %4 = vector.load %arg3[%c0_3, %c0_4] : memref<1x128xf32, #tpu.memory_space<vmem>>, vector<1x128xf32>
    %5 = vector.broadcast %4 : vector<1x128xf32> to vector<16x128xf32>
    %6 = arith.addf %3, %5 : vector<16x128xf32>
    %cst_5 = arith.constant 0.000000e+00 : f32
    %7 = vector.broadcast %cst_5 : f32 to vector<16x128xf32>
    %8 = arith.maximumf %6, %7 : vector<16x128xf32>
    %9 = arith.truncf %8 : vector<16x128xf32> to vector<16x128xbf16>
    %c0_6 = arith.constant 0 : index
    %c0_7 = arith.constant 0 : index
    %10 = vector.load %arg4[%c0_6, %c0_7] : memref<128x4xbf16, #tpu.memory_space<vmem>>, vector<128x4xbf16>
    %cst_8 = arith.constant dense<0.000000e+00> : vector<16x4xf32>
    %11 = tpu.matmul %9, %10, %cst_8 {dimension_numbers = #tpu.dot_dimension_numbers<[1], [0], [0], [1], [0, 0, 1, 1], [], []>} : vector<16x128xbf16>, vector<128x4xbf16>, vector<16x4xf32> -> vector<16x4xf32>
    %c0_9 = arith.constant 0 : index
    %c0_10 = arith.constant 0 : index
    %12 = vector.load %arg5[%c0_9, %c0_10] : memref<1x4xf32, #tpu.memory_space<vmem>>, vector<1x4xf32>
    %13 = vector.broadcast %12 : vector<1x4xf32> to vector<16x4xf32>
    %14 = arith.addf %11, %13 : vector<16x4xf32>
    %15 = math.tanh %14 : vector<16x4xf32>
    %c0_11 = arith.constant 0 : index
    %c0_12 = arith.constant 0 : index
    %16 = vector.load %arg6[%c0_11, %c0_12] : memref<16x4xf32, #tpu.memory_space<vmem>>, vector<16x4xf32>
    tpu.vector_store %arg6[%c0_11, %c0_12], %15 {strides = array<i32>} : memref<16x4xf32, #tpu.memory_space<vmem>>, vector<16x4xf32>,
    return
  }
  func.func @transform_0(%arg0: i32) -> (i32, i32) {
    %c0_i32 = arith.constant 0 : i32
    %c0_i32_0 = arith.constant 0 : i32
    return %arg0, %c0_i32 : i32, i32
  }
  func.func @transform_1(%arg0: i32) -> (i32, i32) {
    %c0_i32 = arith.constant 0 : i32
    %c0_i32_0 = arith.constant 0 : i32
    %c0_i32_1 = arith.constant 0 : i32
    return %c0_i32, %c0_i32_0 : i32, i32
  }
  func.func @transform_2(%arg0: i32) -> (i32, i32) {
    %c0_i32 = arith.constant 0 : i32
    %c0_i32_0 = arith.constant 0 : i32
    %c0_i32_1 = arith.constant 0 : i32
    return %c0_i32, %c0_i32_0 : i32, i32
  }
  func.func @transform_3(%arg0: i32) -> (i32, i32) {
    %c0_i32 = arith.constant 0 : i32
    %c0_i32_0 = arith.constant 0 : i32
    %c0_i32_1 = arith.constant 0 : i32
    return %c0_i32, %c0_i32_0 : i32, i32
  }
  func.func @transform_4(%arg0: i32) -> (i32, i32) {
    %c0_i32 = arith.constant 0 : i32
    %c0_i32_0 = arith.constant 0 : i32
    %c0_i32_1 = arith.constant 0 : i32
    return %c0_i32, %c0_i32_0 : i32, i32
  }
  func.func @transform_5(%arg0: i32) -> (i32, i32) {
    %c0_i32 = arith.constant 0 : i32
    %c0_i32_0 = arith.constant 0 : i32
    return %arg0, %c0_i32 : i32, i32
  }
}

</mosaic_0001>

<llo_original>
// kernel: _lambda_.1
$region0: #{_lambda_.1}
  #allocation0 [shape = 'u32[]', space=smem, size = 0x4, offset = 0x4, fixed_abs, tag = 'smem constant byte address 0x4 - core index']
  #allocation1 [shape = 'u32[144,128]{1,0:T(1,128)}', space=vmem, size = 0x12000, scoped, tag = 'internal scratch']
  %s0 = inlined_call_operand.vmem [shape: f32[16,8], index: 0, kind: input, shape index: {}]
  %s1 = inlined_call_operand.vmem [shape: bf16[8,128], index: 1, kind: input, shape index: {}]
  %s2 = inlined_call_operand.vmem [shape: f32[1,128], index: 2, kind: input, shape index: {}]
  %s3 = inlined_call_operand.hbm [shape: bf16[128,4], index: 3, kind: input, shape index: {}]
  %s4 = inlined_call_operand.vmem [shape: f32[1,4], index: 4, kind: input, shape index: {}]
  %s5 = inlined_call_operand.vmem [shape: f32[16,4], index: 5, kind: output, shape index: {}]
  %s6 = sld [smem:[#allocation0]]
  $region34: #{_lambda_.1} parent=0
    _
  %s8 = ssub.s32 1, %s6
  %s9 = scalar_select 0, %s8, %s6
  $region1: #{_lambda_.1} parent=0
    #allocation2 [shape = 'u8[32768]{0}', space=vmem, size = 0x8000, scoped, tag = 'input window, operand 3, single buffered']
    #allocation3 [shape = 's32[1]{0}', space=sflag, size = 0x4, scoped, tag = 'scoped memory for _lambda_.1']
    %10 = vsyncpa [#allocation3], 0
    // Predicated region
    $region2: #{_lambda_.1} parent=1 // pred_check
      _
    $region3: #{_lambda_.1} parent=1 // pred_check_branch
      %12 = sbr.rel (0) target = $region5
    $region4: #{_lambda_.1} parent=1 // pred_region
      _
    $region5: #{_lambda_.1} parent=1 // pred_fallthru
      _
    // Predicated region
    $region6: #{_lambda_.1} parent=1 // pred_check
      _
    $region7: #{_lambda_.1} parent=1 // pred_check_branch
      %14 = sbr.rel (0) target = $region9
    $region8: #{_lambda_.1} parent=1 // pred_region
      _
    $region9: #{_lambda_.1} parent=1 // pred_fallthru
      _
    // Predicated region
    $region10: #{_lambda_.1} parent=1 // pred_check
      _
    $region11: #{_lambda_.1} parent=1 // pred_check_branch
      %16 = sbr.rel (0) target = $region13
    $region12: #{_lambda_.1} parent=1 // pred_region
      _
    $region13: #{_lambda_.1} parent=1 // pred_fallthru
      _
    // Predicated region
    $region14: #{_lambda_.1} parent=1 // pred_check
      _
    $region15: #{_lambda_.1} parent=1 // pred_check_branch
      %18 = sbr.rel (0) target = $region17
    $region16: #{_lambda_.1} parent=1 // pred_region
      %s20 = ssub.s32 1024, 1024
      %21 = vsyncadd [#allocation3], %s20
      %s22 = sshll.u32 [#allocation2], 4
      %s23 = int_to_ptr.vmem [resolvable:$true] %s22
      %28 = dma.hbm_to_vmem [thread:$0]  %s3, 1024, %s23, [#allocation3], 64, 64, 4
    $region17: #{_lambda_.1} parent=1 // pred_fallthru
      _
    // Predicated region
    $region18: #{_lambda_.1} parent=1 // pred_check
      _
    $region19: #{_lambda_.1} parent=1 // pred_check_branch
      %30 = sbr.rel (0) target = $region21
    $region20: #{_lambda_.1} parent=1 // pred_region
      _
    $region21: #{_lambda_.1} parent=1 // pred_fallthru
      _
    // Predicated region
    $region22: #{_lambda_.1} parent=1 // pred_check
      _
    $region23: #{_lambda_.1} parent=1 // pred_check_branch
      %32 = sbr.rel (0) target = $region25
    $region24: #{_lambda_.1} parent=1 // pred_region
      %33 = dma.done [#allocation3], 1024
    $region25: #{_lambda_.1} parent=1 // pred_fallthru
      _
    %v35 = vld [vmem:[%s0] sm:$0xff]
    %v36 = vld [vmem:[%s0 + $0x8] sm:$0xff]
    %v37 = vpack.c.bf16 %v36, %v35
    %v38 = vld [vmem:[%s1] sm:$0xf]
    %v39 = vld [vmem:[%s2] sm:$0x1]
    %v41 = vlaneseq
    %v42 = vshrl.u32 %v41, 7
    %v43 = vsub.s32 0, %v42
    %v44 = vrot.slane %v39, %v43
    %vm46 = vcmask 64512
    %v48 = vsel %vm46, %v37, 0
    %vm50 = vcmask 1043456
    %v52 = vsel %vm50, %v38, 0
    %54 = vmatprep.subr.bf16.mxu0 0
    %55 = vmatpush1.bf16.msra.mxu0 %v52
    %56 = vmatprep.subr.bf16.mxu0 0
    %57 = vmatpush1.bf16.msra.mxu0 0
    %58 = vmatprep.subr.bf16.mxu0 0
    %59 = vmatpush1.bf16.msra.mxu0 0
    %60 = vmatprep.subr.bf16.mxu0 0
    %61 = vmatpush1.bf16.msra.mxu0 0
    %62 = vmatprep.subr.bf16.mxu0 0
    %63 = vmatpush1.bf16.msra.mxu0 0
    %64 = vmatprep.subr.bf16.mxu0 0
    %65 = vmatpush1.bf16.msra.mxu0 0
    %66 = vmatprep.subr.bf16.mxu0 0
    %67 = vmatpush1.bf16.msra.mxu0 0
    %68 = vmatprep.subr.bf16.mxu0 0
    %69 = vmatpush1.bf16.msra.mxu0 0
    %70 = vmatprep.subr.bf16.mxu0 0
    %71 = vmatpush1.bf16.msra.mxu0 0
    %72 = vmatprep.subr.bf16.mxu0 0
    %73 = vmatpush1.bf16.msra.mxu0 0
    %74 = vmatprep.subr.bf16.mxu0 0
    %75 = vmatpush1.bf16.msra.mxu0 0
    %76 = vmatprep.subr.bf16.mxu0 0
    %77 = vmatpush1.bf16.msra.mxu0 0
    %78 = vmatprep.subr.bf16.mxu0 0
    %79 = vmatpush1.bf16.msra.mxu0 0
    %80 = vmatprep.subr.bf16.mxu0 0
    %81 = vmatpush1.bf16.msra.mxu0 0
    %82 = vmatprep.subr.bf16.mxu0 0
    %83 = vmatpush1.bf16.msra.mxu0 0
    %84 = vmatprep.subr.bf16.mxu0 0
    %85 = vmatpush1.bf16.msra.mxu0 0
    %86 = vmatprep.mubr.bf16.mxu0 0
    %87 = vmatmul.mubr.bf16.gmra.mrb[0].mxu0 %v48
    %v88 = vpop.f32.mrb[0].mxu0
    %v89 = vadd.f32 %v44, %v88
    %v90 = vpop.f32.mrb[0].mxu0
    %v91 = vpop.f32.mrb[0].mxu0
    %v92 = vadd.f32 %v44, %v91
    %v93 = vpop.f32.mrb[0].mxu0
    %94 = vdwg.mxu0
    %v95 = vmax.f32 %v89, 0.0
    %v96 = vmax.f32 %v92, 0.0
    %v97 = vpack.c.bf16 %v96, %v95
    %v98 = vld [vmem:[#allocation2] sm:$0xf]
    %v99 = vld [vmem:[#allocation2 + $0x4] sm:$0xf]
    %v100 = vld [vmem:[#allocation2 + $0x8] sm:$0xf]
    %v101 = vld [vmem:[#allocation2 + $0xc] sm:$0xf]
    %v102 = vld [vmem:[#allocation2 + $0x10] sm:$0xf]
    %v103 = vld [vmem:[#allocation2 + $0x14] sm:$0xf]
    %v104 = vld [vmem:[#allocation2 + $0x18] sm:$0xf]
    %v105 = vld [vmem:[#allocation2 + $0x1c] sm:$0xf]
    %v106 = vld [vmem:[#allocation2 + $0x20] sm:$0xf]
    %v107 = vld [vmem:[#allocation2 + $0x24] sm:$0xf]
    %v108 = vld [vmem:[#allocation2 + $0x28] sm:$0xf]
    %v109 = vld [vmem:[#allocation2 + $0x2c] sm:$0xf]
    %v110 = vld [vmem:[#allocation2 + $0x30] sm:$0xf]
    %v111 = vld [vmem:[#allocation2 + $0x34] sm:$0xf]
    %v112 = vld [vmem:[#allocation2 + $0x38] sm:$0xf]
    %v113 = vld [vmem:[#allocation2 + $0x3c] sm:$0xf]
    %v114 = vld [vmem:[%s4] sm:$0x1]
    %v116 = vlaneseq
    %v117 = vshrl.u32 %v116, 7
    %v118 = vsub.s32 0, %v117
    %v119 = vrot.slane %v114, %v118
    %v137 = vunpack.c.l.b16 %v98
    %v138 = vunpack.c.l.b16 %v99
    %v139 = vunpack.c.l.b16 %v100
    %v140 = vunpack.c.l.b16 %v101
    %v141 = vunpack.c.l.b16 %v102
    %v142 = vunpack.c.l.b16 %v103
    %v143 = vunpack.c.l.b16 %v104
    %v144 = vunpack.c.l.b16 %v105
    %v145 = vunpack.c.l.b16 %v106
    %v146 = vunpack.c.l.b16 %v107
    %v147 = vunpack.c.l.b16 %v108
    %v148 = vunpack.c.l.b16 %v109
    %v149 = vunpack.c.l.b16 %v110
    %v150 = vunpack.c.l.b16 %v111
    %v151 = vunpack.c.l.b16 %v112
    %v152 = vunpack.c.l.b16 %v113
    %v153 = vpack.c.b16 %v138, %v137
    %v154 = vpack.c.b16 %v140, %v139
    %v155 = vpack.c.b16 %v142, %v141
    %v156 = vpack.c.b16 %v144, %v143
    %v157 = vpack.c.b16 %v146, %v145
    %v158 = vpack.c.b16 %v148, %v147
    %v159 = vpack.c.b16 %v150, %v149
    %v160 = vpack.c.b16 %v152, %v151
    %169 = vmatprep.subr.bf16.mxu0 0
    %170 = vmatpush1.bf16.msra.mxu0 %v153
    %171 = vmatprep.subr.bf16.mxu0 0
    %172 = vmatpush1.bf16.msra.mxu0 %v154
    %173 = vmatprep.subr.bf16.mxu0 0
    %174 = vmatpush1.bf16.msra.mxu0 %v155
    %175 = vmatprep.subr.bf16.mxu0 0
    %176 = vmatpush1.bf16.msra.mxu0 %v156
    %177 = vmatprep.subr.bf16.mxu0 0
    %178 = vmatpush1.bf16.msra.mxu0 %v157
    %179 = vmatprep.subr.bf16.mxu0 0
    %180 = vmatpush1.bf16.msra.mxu0 %v158
    %181 = vmatprep.subr.bf16.mxu0 0
    %182 = vmatpush1.bf16.msra.mxu0 %v159
    %183 = vmatprep.subr.bf16.mxu0 0
    %184 = vmatpush1.bf16.msra.mxu0 %v160
    %185 = vmatprep.subr.bf16.mxu0 0
    %186 = vmatpush1.bf16.msra.mxu0 0
    %187 = vmatprep.subr.bf16.mxu0 0
    %188 = vmatpush1.bf16.msra.mxu0 0
    %189 = vmatprep.subr.bf16.mxu0 0
    %190 = vmatpush1.bf16.msra.mxu0 0
    %191 = vmatprep.subr.bf16.mxu0 0
    %192 = vmatpush1.bf16.msra.mxu0 0
    %193 = vmatprep.subr.bf16.mxu0 0
    %194 = vmatpush1.bf16.msra.mxu0 0
    %195 = vmatprep.subr.bf16.mxu0 0
    %196 = vmatpush1.bf16.msra.mxu0 0
    %197 = vmatprep.subr.bf16.mxu0 0
    %198 = vmatpush1.bf16.msra.mxu0 0
    %199 = vmatprep.subr.bf16.mxu0 0
    %200 = vmatpush1.bf16.msra.mxu0 0
    %201 = vmatprep.mubr.bf16.mxu0 0
    %202 = vmatmul.mubr.bf16.gmra.mrb[0].mxu0 %v97
    %v203 = vpop.f32.mrb[0].mxu0
    %v204 = vadd.f32 %v119, %v203
    %v205 = vpop.f32.mrb[0].mxu0
    %v206 = vpop.f32.mrb[0].mxu0
    %v207 = vadd.f32 %v119, %v206
    %v208 = vpop.f32.mrb[0].mxu0
    %209 = vdwg.mxu0
    %v210 = vtanh.pop %v204
    %v211 = vtanh.pop %v207
    %vm212 = vcmask 31744
    %213 = vst.msk [vmem:[%s5] sm:$0xff] %vm212, %v210
    %214 = vst.msk [vmem:[%s5 + $0x8] sm:$0xff] %vm212, %v211
    // Predicated region
    $region26: #{_lambda_.1} parent=1 // pred_check
      _
    $region27: #{_lambda_.1} parent=1 // pred_check_branch
      %216 = sbr.rel (0) target = $region29
    $region28: #{_lambda_.1} parent=1 // pred_region
      _
    $region29: #{_lambda_.1} parent=1 // pred_fallthru
      _
    // Predicated region
    $region30: #{_lambda_.1} parent=1 // pred_check
      _
    $region31: #{_lambda_.1} parent=1 // pred_check_branch
      %218 = sbr.rel (0) target = $region33
    $region32: #{_lambda_.1} parent=1 // pred_region
      _
    $region33: #{_lambda_.1} parent=1 // pred_fallthru
      _
    %219 = vsyncpa [#allocation3], 1

</llo_original>
